<compile_context>
chip_gen: v5e
topology: v5e:2x2
jax: 0.10.0
libtpu: 0.0.40
codegen_flags: <defaults>
</compile_context>

<pallas_src>
import functools

import jax
import jax.numpy as jnp
from jax.experimental import pallas as pl
from jax.experimental.pallas import tpu as pltpu


# ----------------------------- config ---------------------------------------
class Config:
    vocab_size = 256
    embedding_size = 32          # == hidden_size (required by weight tying)
    hidden_size = 32
    attention_key_size = 16      # s (must be even for RoPE)
    expansion = 2                # GAU expansion -> e = expansion * hidden
    num_layers = 2
    block_size = 16
    eps = 1e-6
    use_bias = False
    hidden_dropout = 0.0
    deepnorm = False


# ----------------------------- fused kernel ----------------------------------
def fused_gpt_kernel(x_ref, wuvz_ref, gb_ref, wo_ref, cos_ref, sin_ref,
                     mask_ref, wlm_ref, logits_ref, *, e, s, eps, num_layers):
    """grid = (B,).  One batch element per program.

    All per-layer weights are VMEM-resident (stacked leading L axis, constant
    index_map); the L-layer loop is unrolled statically inside the kernel and
    the residual-stream activation x is a plain loop-carried value.  The final
    RMSNorm + tied lm_head on the last token writes the lane-dense (1, V)
    logits block.
    """
    hs = s // 2
    x = x_ref[0]                                               # (T, H)
    cos = cos_ref[...]                                         # (T, hs)
    sin = sin_ref[...]                                         # (T, hs)
    mask = mask_ref[...]                                       # (T, T) with 1/(s*T) folded
    dn = (((1,), (1,)), ((), ()))

    for li in range(num_layers):                               # static unroll
        # --- RMSNorm (ln weight folded into w_uvz) ---
        ms = jnp.mean(x * x, axis=-1, keepdims=True)
        xn = x * jax.lax.rsqrt(ms + eps)                       # (T, H)

        # --- fused u / v / z projection + SiLU ---
        uvz = jnp.dot(xn, wuvz_ref[li], preferred_element_type=jnp.float32)
        uvz = uvz * jax.nn.sigmoid(uvz)                        # (T, 2e+s)
        u = uvz[:, :e]                                         # (T, e)
        v = uvz[:, e:2 * e]                                    # (T, e)
        z = uvz[:, 2 * e:]                                     # (T, s)  half layout

        # --- q / k via per-dim scale + offset (gamma/beta packed, de-interleaved) ---
        gb = gb_ref[li]                                        # (4, s): [g_q, g_k, b_q, b_k]
        q = z * gb[0:1, :] + gb[2:3, :]                        # (T, s)
        k = z * gb[1:2, :] + gb[3:4, :]                        # (T, s)

        # --- RoPE in de-interleaved ("half") layout: pure VPU math ---
        q1, q2 = q[:, :hs], q[:, hs:]
        k1, k2 = k[:, :hs], k[:, hs:]
        qr = jnp.concatenate([q1 * cos - q2 * sin, q2 * cos + q1 * sin], axis=-1)
        kr = jnp.concatenate([k1 * cos - k2 * sin, k2 * cos + k1 * sin], axis=-1)

        # --- relu^2 causal attention; 1/sqrt(s) and 1/T folded into mask ---
        scores = jax.lax.dot_general(qr, kr, dn,
                                     preferred_element_type=jnp.float32)  # (T, T)
        a = jnp.maximum(scores, 0.0)
        a = a * a * mask

        # --- gate + output projection + residual ---
        out = u * jnp.dot(a, v, preferred_element_type=jnp.float32)       # (T, e)
        x = x + jnp.dot(out, wo_ref[li], preferred_element_type=jnp.float32)

    # --- final RMSNorm (ln_f folded into wlm) + tied lm_head on last token ---
    T = x.shape[0]
    xl = x[T - 1:T, :]                                         # (1, H)
    ms2 = jnp.mean(xl * xl, axis=-1, keepdims=True)
    xln = xl * jax.lax.rsqrt(ms2 + eps)
    logits_ref[0] = jnp.dot(xln, wlm_ref[...],
                            preferred_element_type=jnp.float32)           # (1, V)


# ----------------------------- glue -------------------------------------------
def get_sinusoidal_id(max_length, output_dim):
    pos = jnp.arange(max_length, dtype=jnp.float32)
    idx = jnp.arange(output_dim // 2, dtype=jnp.float32)
    inv = jnp.power(10000.0, -2.0 * idx / output_dim)
    return jnp.einsum("n,d->nd", pos, inv)                     # (max_len, s/2)


def init_params(cfg, key):
    H, V, s = cfg.hidden_size, cfg.vocab_size, cfg.attention_key_size
    e = cfg.expansion * H
    keys = jax.random.split(key, 2 + 4 * cfg.num_layers)
    params = {
        # tied embedding / lm_head weight, shape (V, H)
        "embedding": 0.02 * jax.random.normal(keys[0], (V, H), jnp.float32),
        "ln_f_w": jnp.ones((1, H), jnp.float32),
        "layers": [],
    }
    for li in range(cfg.num_layers):
        k0, k1, k2, k3 = keys[2 + 4 * li: 6 + 4 * li]
        params["layers"].append({
            "ln_w": jnp.ones((1, H), jnp.float32),
            "w_uvz": 0.02 * jax.random.normal(k0, (H, 2 * e + s), jnp.float32),
            "gamma": 1.0 + 0.02 * jax.random.normal(k1, (2, s), jnp.float32),
            "beta": 0.02 * jax.random.normal(k2, (2, s), jnp.float32),
            "w_o": 0.02 * jax.random.normal(k3, (e, H), jnp.float32),
        })
    return params


def gpt_forward(idx, params, cfg):
    B, T = idx.shape
    assert T <= cfg.block_size
    H, s, V = cfg.hidden_size, cfg.attention_key_size, cfg.vocab_size
    e = cfg.expansion * H
    hs = s // 2
    L = cfg.num_layers

    # token embedding lookup (glue; dropout is identity at inference)
    x = jnp.take(params["embedding"], idx, axis=0).astype(jnp.float32)    # (B,T,H)

    # RoPE tables in half (de-interleaved) layout: (T, s/2)
    sinus = get_sinusoidal_id(cfg.block_size, s)[:T]
    cos_h = jnp.cos(sinus)
    sin_h = jnp.sin(sinus)

    # de-interleave permutation (even RoPE dims first, odd dims second); applied
    # to the z-columns of w_uvz and to gamma/beta so the kernel needs no
    # rotation matmul -- the column permutation leaves q.k dot products unchanged.
    perm = jnp.concatenate([jnp.arange(0, s, 2), jnp.arange(1, s, 2)])

    # stack per-layer params with a leading L axis (VMEM-resident, fetched once).
    # ln_w is folded into w_uvz rows (RMSNorm weight = diagonal scale on the
    # contraction dim), so the kernel computes only x * rsqrt(mean(x^2)+eps).
    def fold_uvz(lp):
        w = jnp.concatenate([lp["w_uvz"][:, :2 * e],
                             jnp.take(lp["w_uvz"][:, 2 * e:], perm, axis=1)],
                            axis=1)                                       # (H, 2e+s)
        return lp["ln_w"][0][:, None] * w

    w_uvz = jnp.stack([fold_uvz(lp) for lp in params["layers"]])          # (L,H,2e+s)
    # gamma/beta packed into one tensor: rows [gamma_q, gamma_k, beta_q, beta_k]
    gamma_beta = jnp.stack(
        [jnp.take(jnp.concatenate([lp["gamma"], lp["beta"]], axis=0), perm, axis=1)
         for lp in params["layers"]])                                     # (L,4,s)
    w_o = jnp.stack([lp["w_o"] for lp in params["layers"]])               # (L,e,H)

    # causal mask with the relu^2 attention scaling (1/s from 1/sqrt(s)^2, 1/T) folded in
    row = jnp.arange(T)[:, None]
    col = jnp.arange(T)[None, :]
    mask = jnp.where(col <= row, 1.0 / (s * T), 0.0).astype(jnp.float32)  # (T,T)

    # tied lm_head weight pre-transposed to (H, V) with ln_f folded in:
    # lane-dense head output, no in-kernel transpose, no separate ln_f input.
    w_lm_t = params["ln_f_w"][0][:, None] * jnp.transpose(params["embedding"])  # (H,V)

    kern = functools.partial(fused_gpt_kernel, e=e, s=s, eps=cfg.eps,
                             num_layers=L)
    logits = pl.pallas_call(
        kern,
        out_shape=jax.ShapeDtypeStruct((B, 1, V), jnp.float32),
        grid=(B,),
        in_specs=[
            pl.BlockSpec((1, T, H), lambda b: (b, 0, 0)),                 # embeddings
            pl.BlockSpec((L, H, 2 * e + s), lambda b: (0, 0, 0)),         # w_uvz (ln folded)
            pl.BlockSpec((L, 4, s), lambda b: (0, 0, 0)),                 # gamma+beta packed
            pl.BlockSpec((L, e, H), lambda b: (0, 0, 0)),                 # w_o
            pl.BlockSpec((T, hs), lambda b: (0, 0)),                      # cos (half layout)
            pl.BlockSpec((T, hs), lambda b: (0, 0)),                      # sin (half layout)
            pl.BlockSpec((T, T), lambda b: (0, 0)),                       # scaled causal mask
            pl.BlockSpec((H, V), lambda b: (0, 0)),                       # lm_head^T (ln_f folded)
        ],
        out_specs=pl.BlockSpec((1, 1, V), lambda b: (b, 0, 0)),
        compiler_params=pltpu.CompilerParams(
            dimension_semantics=("parallel",)),
    )(x, w_uvz, gamma_beta, w_o, cos_h, sin_h, mask, w_lm_t)
    return logits                                                         # (B,1,V)


# ----------------------------- pure-JAX reference -----------------------------
def gpt_forward_reference(idx, params, cfg):
    """Original interleaved-RoPE formulation, plain jnp (for correctness check)."""
    B, T = idx.shape
    H, s = cfg.hidden_size, cfg.attention_key_size
    e = cfg.expansion * H
    hp = jax.lax.Precision.HIGHEST

    x = jnp.take(params["embedding"], idx, axis=0).astype(jnp.float32)
    sinus = get_sinusoidal_id(cfg.block_size, s)[:T]
    sin_r = jnp.repeat(jnp.sin(sinus), 2, axis=-1)
    cos_r = jnp.repeat(jnp.cos(sinus), 2, axis=-1)

    def rot_every_two(v):
        v2 = v.reshape(*v.shape[:-1], s // 2, 2)
        v2 = jnp.stack([-v2[..., 1], v2[..., 0]], axis=-1)
        return v2.reshape(*v.shape)

    def rmsnorm(v, w):
        return v * jax.lax.rsqrt(jnp.mean(v * v, axis=-1, keepdims=True) + cfg.eps) * w

    row = jnp.arange(T)[:, None]
    col = jnp.arange(T)[None, :]
    causal = col <= row

    for lp in params["layers"]:
        xn = rmsnorm(x, lp["ln_w"][0])
        uvz = jnp.einsum("bth,hd->btd", xn, lp["w_uvz"], precision=hp)
        uvz = uvz * jax.nn.sigmoid(uvz)
        u, v, z = uvz[..., :e], uvz[..., e:2 * e], uvz[..., 2 * e:]
        q = z * lp["gamma"][0] + lp["beta"][0]
        k = z * lp["gamma"][1] + lp["beta"][1]
        q = q * cos_r + rot_every_two(q) * sin_r
        k = k * cos_r + rot_every_two(k) * sin_r
        sc = jnp.einsum("bts,bus->btu", q, k, precision=hp) / jnp.sqrt(jnp.float32(s))
        a = jnp.maximum(sc, 0.0)
        a = a * a / jnp.float32(T)
        a = jnp.where(causal, a, 0.0)
        out = u * jnp.einsum("btu,bue->bte", a, v, precision=hp)
        x = x + jnp.einsum("bte,eh->bth", out, lp["w_o"], precision=hp)

    xl = rmsnorm(x[:, -1, :], params["ln_f_w"][0])
    logits = jnp.einsum("bh,vh->bv", xl, params["embedding"], precision=hp)
    return logits[:, None, :]


# ----------------------------- main --------------------------------------------
if __name__ == "__main__":
    cfg = Config()
    key = jax.random.PRNGKey(0)
    k_param, k_idx = jax.random.split(key)

    params = init_params(cfg, k_param)

    B, T = 2, 8
    idx = jax.random.randint(k_idx, (B, T), 0, cfg.vocab_size, dtype=jnp.int32)

    fwd = jax.jit(lambda i, p: gpt_forward(i, p, cfg))
    logits = fwd(idx, params)
    jax.block_until_ready(logits)

    ref = gpt_forward_reference(idx, params, cfg)

    assert logits.shape == (B, 1, cfg.vocab_size)
    assert bool(jnp.all(jnp.isfinite(logits)))
    assert bool(jnp.allclose(logits, ref, atol=2e-3, rtol=2e-3)), (
        float(jnp.max(jnp.abs(logits - ref))))
    print("KERNEL_OK")
</pallas_src>

<mosaic_0001>
module attributes {stable_mosaic.version = 11 : i64} {
  func.func @fused_gpt_kernel(%arg0: i32, %arg1: memref<1x8x32xf32, #tpu.memory_space<vmem>>, %arg2: memref<2x32x144xf32, #tpu.memory_space<vmem>>, %arg3: memref<2x4x16xf32, #tpu.memory_space<vmem>>, %arg4: memref<2x64x32xf32, #tpu.memory_space<vmem>>, %arg5: memref<8x8xf32, #tpu.memory_space<vmem>>, %arg6: memref<8x8xf32, #tpu.memory_space<vmem>>, %arg7: memref<8x8xf32, #tpu.memory_space<vmem>>, %arg8: memref<32x256xf32, #tpu.memory_space<vmem>>, %arg9: memref<1x1x256xf32, #tpu.memory_space<vmem>>) attributes {dimension_semantics = [#tpu.dimension_semantics<parallel>], iteration_bounds = array<i64: 2>, scalar_prefetch = 0 : i64, scratch_operands = 0 : i64, tpu.core_type = #tpu.core_type<tc>, window_params = [{transform_indices = @transform_0, window_bounds = array<i64: 1, 8, 32>}, {pipeline_mode = #tpu.pipeline_mode<synchronous>, transform_indices = @transform_1, window_bounds = array<i64: 2, 32, 144>}, {pipeline_mode = #tpu.pipeline_mode<synchronous>, transform_indices = @transform_2, window_bounds = array<i64: 2, 4, 16>}, {pipeline_mode = #tpu.pipeline_mode<synchronous>, transform_indices = @transform_3, window_bounds = array<i64: 2, 64, 32>}, {pipeline_mode = #tpu.pipeline_mode<synchronous>, transform_indices = @transform_4, window_bounds = array<i64: 8, 8>}, {pipeline_mode = #tpu.pipeline_mode<synchronous>, transform_indices = @transform_5, window_bounds = array<i64: 8, 8>}, {pipeline_mode = #tpu.pipeline_mode<synchronous>, transform_indices = @transform_6, window_bounds = array<i64: 8, 8>}, {pipeline_mode = #tpu.pipeline_mode<synchronous>, transform_indices = @transform_7, window_bounds = array<i64: 32, 256>}, {transform_indices = @transform_8, window_bounds = array<i64: 1, 1, 256>}]} {
    %c0 = arith.constant 0 : index
    %c0_0 = arith.constant 0 : index
    %c0_1 = arith.constant 0 : index
    %0 = vector.load %arg1[%c0, %c0_0, %c0_1] : memref<1x8x32xf32, #tpu.memory_space<vmem>>, vector<1x8x32xf32>
    %1 = vector.shape_cast %0 : vector<1x8x32xf32> to vector<8x32xf32>
    %c0_2 = arith.constant 0 : index
    %c0_3 = arith.constant 0 : index
    %2 = vector.load %arg5[%c0_2, %c0_3] : memref<8x8xf32, #tpu.memory_space<vmem>>, vector<8x8xf32>
    %c0_4 = arith.constant 0 : index
    %c0_5 = arith.constant 0 : index
    %3 = vector.load %arg6[%c0_4, %c0_5] : memref<8x8xf32, #tpu.memory_space<vmem>>, vector<8x8xf32>
    %c0_6 = arith.constant 0 : index
    %c0_7 = arith.constant 0 : index
    %4 = vector.load %arg7[%c0_6, %c0_7] : memref<8x8xf32, #tpu.memory_space<vmem>>, vector<8x8xf32>
    %5 = arith.mulf %1, %1 : vector<8x32xf32>
    %cst = arith.constant dense<0.000000e+00> : vector<8xf32>
    %6 = vector.multi_reduction <add>, %5, %cst [1] : vector<8x32xf32> to vector<8xf32>
    %7 = vector.shape_cast %6 : vector<8xf32> to vector<8x1xf32>
    %cst_8 = arith.constant 3.200000e+01 : f32
    %8 = vector.broadcast %cst_8 : f32 to vector<8x1xf32>
    %9 = arith.divf %7, %8 : vector<8x1xf32>
    %cst_9 = arith.constant 9.99999997E-7 : f32
    %10 = vector.broadcast %cst_9 : f32 to vector<8x1xf32>
    %11 = arith.addf %9, %10 : vector<8x1xf32>
    %12 = math.rsqrt %11 : vector<8x1xf32>
    %13 = vector.broadcast %12 : vector<8x1xf32> to vector<8x32xf32>
    %14 = arith.mulf %1, %13 : vector<8x32xf32>
    %c0_10 = arith.constant 0 : index
    %c0_11 = arith.constant 0 : index
    %c0_12 = arith.constant 0 : index
    %15 = vector.load %arg2[%c0_10, %c0_11, %c0_12] : memref<2x32x144xf32, #tpu.memory_space<vmem>>, vector<1x32x144xf32>
    %16 = vector.shape_cast %15 : vector<1x32x144xf32> to vector<32x144xf32>
    %cst_13 = arith.constant dense<0.000000e+00> : vector<8x144xf32>
    %17 = tpu.matmul %14, %16, %cst_13 {dimension_numbers = #tpu.dot_dimension_numbers<[1], [0], [0], [1], [0, 0, 1, 1], [], []>} : vector<8x32xf32>, vector<32x144xf32>, vector<8x144xf32> -> vector<8x144xf32>
    %18 = arith.negf %17 : vector<8x144xf32>
    %19 = math.exp %18 : vector<8x144xf32>
    %cst_14 = arith.constant 1.000000e+00 : f32
    %20 = vector.broadcast %cst_14 : f32 to vector<8x144xf32>
    %21 = arith.addf %20, %19 : vector<8x144xf32>
    %22 = arith.divf %20, %21 : vector<8x144xf32>
    %23 = arith.mulf %17, %22 : vector<8x144xf32>
    %24 = vector.extract_strided_slice %23 {offsets = [0, 0], sizes = [8, 64], strides = [1, 1]} : vector<8x144xf32> to vector<8x64xf32>
    %25 = vector.extract_strided_slice %23 {offsets = [0, 64], sizes = [8, 64], strides = [1, 1]} : vector<8x144xf32> to vector<8x64xf32>
    %26 = vector.extract_strided_slice %23 {offsets = [0, 128], sizes = [8, 16], strides = [1, 1]} : vector<8x144xf32> to vector<8x16xf32>
    %c0_15 = arith.constant 0 : index
    %c0_16 = arith.constant 0 : index
    %c0_17 = arith.constant 0 : index
    %27 = vector.load %arg3[%c0_15, %c0_16, %c0_17] : memref<2x4x16xf32, #tpu.memory_space<vmem>>, vector<1x4x16xf32>
    %28 = vector.shape_cast %27 : vector<1x4x16xf32> to vector<4x16xf32>
    %29 = vector.extract_strided_slice %28 {offsets = [0, 0], sizes = [1, 16], strides = [1, 1]} : vector<4x16xf32> to vector<1x16xf32>
    %30 = vector.broadcast %29 : vector<1x16xf32> to vector<8x16xf32>
    %31 = arith.mulf %26, %30 : vector<8x16xf32>
    %32 = vector.extract_strided_slice %28 {offsets = [2, 0], sizes = [1, 16], strides = [1, 1]} : vector<4x16xf32> to vector<1x16xf32>
    %33 = vector.broadcast %32 : vector<1x16xf32> to vector<8x16xf32>
    %34 = arith.addf %31, %33 : vector<8x16xf32>
    %35 = vector.extract_strided_slice %28 {offsets = [1, 0], sizes = [1, 16], strides = [1, 1]} : vector<4x16xf32> to vector<1x16xf32>
    %36 = vector.broadcast %35 : vector<1x16xf32> to vector<8x16xf32>
    %37 = arith.mulf %26, %36 : vector<8x16xf32>
    %38 = vector.extract_strided_slice %28 {offsets = [3, 0], sizes = [1, 16], strides = [1, 1]} : vector<4x16xf32> to vector<1x16xf32>
    %39 = vector.broadcast %38 : vector<1x16xf32> to vector<8x16xf32>
    %40 = arith.addf %37, %39 : vector<8x16xf32>
    %41 = vector.extract_strided_slice %34 {offsets = [0, 0], sizes = [8, 8], strides = [1, 1]} : vector<8x16xf32> to vector<8x8xf32>
    %42 = vector.extract_strided_slice %34 {offsets = [0, 8], sizes = [8, 8], strides = [1, 1]} : vector<8x16xf32> to vector<8x8xf32>
    %43 = vector.extract_strided_slice %40 {offsets = [0, 0], sizes = [8, 8], strides = [1, 1]} : vector<8x16xf32> to vector<8x8xf32>
    %44 = vector.extract_strided_slice %40 {offsets = [0, 8], sizes = [8, 8], strides = [1, 1]} : vector<8x16xf32> to vector<8x8xf32>
    %45 = arith.mulf %41, %2 : vector<8x8xf32>
    %46 = arith.mulf %42, %3 : vector<8x8xf32>
    %47 = arith.subf %45, %46 : vector<8x8xf32>
    %48 = arith.mulf %42, %2 : vector<8x8xf32>
    %49 = arith.mulf %41, %3 : vector<8x8xf32>
    %50 = arith.addf %48, %49 : vector<8x8xf32>
    %51 = tpu.concatenate %47, %50 in 1 : vector<8x8xf32>, vector<8x8xf32> -> vector<8x16xf32>
    %52 = arith.mulf %43, %2 : vector<8x8xf32>
    %53 = arith.mulf %44, %3 : vector<8x8xf32>
    %54 = arith.subf %52, %53 : vector<8x8xf32>
    %55 = arith.mulf %44, %2 : vector<8x8xf32>
    %56 = arith.mulf %43, %3 : vector<8x8xf32>
    %57 = arith.addf %55, %56 : vector<8x8xf32>
    %58 = tpu.concatenate %54, %57 in 1 : vector<8x8xf32>, vector<8x8xf32> -> vector<8x16xf32>
    %cst_18 = arith.constant dense<0.000000e+00> : vector<8x8xf32>
    %59 = tpu.matmul %51, %58, %cst_18 {dimension_numbers = #tpu.dot_dimension_numbers<[1], [1], [0], [0], [0, 0, 1, 0], [], []>} : vector<8x16xf32>, vector<8x16xf32>, vector<8x8xf32> -> vector<8x8xf32>
    %cst_19 = arith.constant 0.000000e+00 : f32
    %60 = vector.broadcast %cst_19 : f32 to vector<8x8xf32>
    %61 = arith.maximumf %59, %60 : vector<8x8xf32>
    %62 = arith.mulf %61, %61 : vector<8x8xf32>
    %63 = arith.mulf %62, %4 : vector<8x8xf32>
    %cst_20 = arith.constant dense<0.000000e+00> : vector<8x64xf32>
    %64 = tpu.matmul %63, %25, %cst_20 {dimension_numbers = #tpu.dot_dimension_numbers<[1], [0], [0], [1], [0, 0, 1, 1], [], []>} : vector<8x8xf32>, vector<8x64xf32>, vector<8x64xf32> -> vector<8x64xf32>
    %65 = arith.mulf %24, %64 : vector<8x64xf32>
    %c0_21 = arith.constant 0 : index
    %c0_22 = arith.constant 0 : index
    %c0_23 = arith.constant 0 : index
    %66 = vector.load %arg4[%c0_21, %c0_22, %c0_23] : memref<2x64x32xf32, #tpu.memory_space<vmem>>, vector<1x64x32xf32>
    %67 = vector.shape_cast %66 : vector<1x64x32xf32> to vector<64x32xf32>
    %cst_24 = arith.constant dense<0.000000e+00> : vector<8x32xf32>
    %68 = tpu.matmul %65, %67, %cst_24 {dimension_numbers = #tpu.dot_dimension_numbers<[1], [0], [0], [1], [0, 0, 1, 1], [], []>} : vector<8x64xf32>, vector<64x32xf32>, vector<8x32xf32> -> vector<8x32xf32>
    %69 = arith.addf %1, %68 : vector<8x32xf32>
    %70 = arith.mulf %69, %69 : vector<8x32xf32>
    %cst_25 = arith.constant dense<0.000000e+00> : vector<8xf32>
    %71 = vector.multi_reduction <add>, %70, %cst_25 [1] : vector<8x32xf32> to vector<8xf32>
    %72 = vector.shape_cast %71 : vector<8xf32> to vector<8x1xf32>
    %cst_26 = arith.constant 3.200000e+01 : f32
    %73 = vector.broadcast %cst_26 : f32 to vector<8x1xf32>
    %74 = arith.divf %72, %73 : vector<8x1xf32>
    %cst_27 = arith.constant 9.99999997E-7 : f32
    %75 = vector.broadcast %cst_27 : f32 to vector<8x1xf32>
    %76 = arith.addf %74, %75 : vector<8x1xf32>
    %77 = math.rsqrt %76 : vector<8x1xf32>
    %78 = vector.broadcast %77 : vector<8x1xf32> to vector<8x32xf32>
    %79 = arith.mulf %69, %78 : vector<8x32xf32>
    %c1 = arith.constant 1 : index
    %c0_28 = arith.constant 0 : index
    %c0_29 = arith.constant 0 : index
    %80 = vector.load %arg2[%c1, %c0_28, %c0_29] : memref<2x32x144xf32, #tpu.memory_space<vmem>>, vector<1x32x144xf32>
    %81 = vector.shape_cast %80 : vector<1x32x144xf32> to vector<32x144xf32>
    %cst_30 = arith.constant dense<0.000000e+00> : vector<8x144xf32>
    %82 = tpu.matmul %79, %81, %cst_30 {dimension_numbers = #tpu.dot_dimension_numbers<[1], [0], [0], [1], [0, 0, 1, 1], [], []>} : vector<8x32xf32>, vector<32x144xf32>, vector<8x144xf32> -> vector<8x144xf32>
    %83 = arith.negf %82 : vector<8x144xf32>
    %84 = math.exp %83 : vector<8x144xf32>
    %cst_31 = arith.constant 1.000000e+00 : f32
    %85 = vector.broadcast %cst_31 : f32 to vector<8x144xf32>
    %86 = arith.addf %85, %84 : vector<8x144xf32>
    %87 = arith.divf %85, %86 : vector<8x144xf32>
    %88 = arith.mulf %82, %87 : vector<8x144xf32>
    %89 = vector.extract_strided_slice %88 {offsets = [0, 0], sizes = [8, 64], strides = [1, 1]} : vector<8x144xf32> to vector<8x64xf32>
    %90 = vector.extract_strided_slice %88 {offsets = [0, 64], sizes = [8, 64], strides = [1, 1]} : vector<8x144xf32> to vector<8x64xf32>
    %91 = vector.extract_strided_slice %88 {offsets = [0, 128], sizes = [8, 16], strides = [1, 1]} : vector<8x144xf32> to vector<8x16xf32>
    %c1_32 = arith.constant 1 : index
    %c0_33 = arith.constant 0 : index
    %c0_34 = arith.constant 0 : index
    %92 = vector.load %arg3[%c1_32, %c0_33, %c0_34] : memref<2x4x16xf32, #tpu.memory_space<vmem>>, vector<1x4x16xf32>
    %93 = vector.shape_cast %92 : vector<1x4x16xf32> to vector<4x16xf32>
    %94 = vector.extract_strided_slice %93 {offsets = [0, 0], sizes = [1, 16], strides = [1, 1]} : vector<4x16xf32> to vector<1x16xf32>
    %95 = vector.broadcast %94 : vector<1x16xf32> to vector<8x16xf32>
    %96 = arith.mulf %91, %95 : vector<8x16xf32>
    %97 = vector.extract_strided_slice %93 {offsets = [2, 0], sizes = [1, 16], strides = [1, 1]} : vector<4x16xf32> to vector<1x16xf32>
    %98 = vector.broadcast %97 : vector<1x16xf32> to vector<8x16xf32>
    %99 = arith.addf %96, %98 : vector<8x16xf32>
    %100 = vector.extract_strided_slice %93 {offsets = [1, 0], sizes = [1, 16], strides = [1, 1]} : vector<4x16xf32> to vector<1x16xf32>
    %101 = vector.broadcast %100 : vector<1x16xf32> to vector<8x16xf32>
    %102 = arith.mulf %91, %101 : vector<8x16xf32>
    %103 = vector.extract_strided_slice %93 {offsets = [3, 0], sizes = [1, 16], strides = [1, 1]} : vector<4x16xf32> to vector<1x16xf32>
    %104 = vector.broadcast %103 : vector<1x16xf32> to vector<8x16xf32>
    %105 = arith.addf %102, %104 : vector<8x16xf32>
    %106 = vector.extract_strided_slice %99 {offsets = [0, 0], sizes = [8, 8], strides = [1, 1]} : vector<8x16xf32> to vector<8x8xf32>
    %107 = vector.extract_strided_slice %99 {offsets = [0, 8], sizes = [8, 8], strides = [1, 1]} : vector<8x16xf32> to vector<8x8xf32>
    %108 = vector.extract_strided_slice %105 {offsets = [0, 0], sizes = [8, 8], strides = [1, 1]} : vector<8x16xf32> to vector<8x8xf32>
    %109 = vector.extract_strided_slice %105 {offsets = [0, 8], sizes = [8, 8], strides = [1, 1]} : vector<8x16xf32> to vector<8x8xf32>
    %110 = arith.mulf %106, %2 : vector<8x8xf32>
    %111 = arith.mulf %107, %3 : vector<8x8xf32>
    %112 = arith.subf %110, %111 : vector<8x8xf32>
    %113 = arith.mulf %107, %2 : vector<8x8xf32>
    %114 = arith.mulf %106, %3 : vector<8x8xf32>
    %115 = arith.addf %113, %114 : vector<8x8xf32>
    %116 = tpu.concatenate %112, %115 in 1 : vector<8x8xf32>, vector<8x8xf32> -> vector<8x16xf32>
    %117 = arith.mulf %108, %2 : vector<8x8xf32>
    %118 = arith.mulf %109, %3 : vector<8x8xf32>
    %119 = arith.subf %117, %118 : vector<8x8xf32>
    %120 = arith.mulf %109, %2 : vector<8x8xf32>
    %121 = arith.mulf %108, %3 : vector<8x8xf32>
    %122 = arith.addf %120, %121 : vector<8x8xf32>
    %123 = tpu.concatenate %119, %122 in 1 : vector<8x8xf32>, vector<8x8xf32> -> vector<8x16xf32>
    %cst_35 = arith.constant dense<0.000000e+00> : vector<8x8xf32>
    %124 = tpu.matmul %116, %123, %cst_35 {dimension_numbers = #tpu.dot_dimension_numbers<[1], [1], [0], [0], [0, 0, 1, 0], [], []>} : vector<8x16xf32>, vector<8x16xf32>, vector<8x8xf32> -> vector<8x8xf32>
    %cst_36 = arith.constant 0.000000e+00 : f32
    %125 = vector.broadcast %cst_36 : f32 to vector<8x8xf32>
    %126 = arith.maximumf %124, %125 : vector<8x8xf32>
    %127 = arith.mulf %126, %126 : vector<8x8xf32>
    %128 = arith.mulf %127, %4 : vector<8x8xf32>
    %cst_37 = arith.constant dense<0.000000e+00> : vector<8x64xf32>
    %129 = tpu.matmul %128, %90, %cst_37 {dimension_numbers = #tpu.dot_dimension_numbers<[1], [0], [0], [1], [0, 0, 1, 1], [], []>} : vector<8x8xf32>, vector<8x64xf32>, vector<8x64xf32> -> vector<8x64xf32>
    %130 = arith.mulf %89, %129 : vector<8x64xf32>
    %c1_38 = arith.constant 1 : index
    %c0_39 = arith.constant 0 : index
    %c0_40 = arith.constant 0 : index
    %131 = vector.load %arg4[%c1_38, %c0_39, %c0_40] : memref<2x64x32xf32, #tpu.memory_space<vmem>>, vector<1x64x32xf32>
    %132 = vector.shape_cast %131 : vector<1x64x32xf32> to vector<64x32xf32>
    %cst_41 = arith.constant dense<0.000000e+00> : vector<8x32xf32>
    %133 = tpu.matmul %130, %132, %cst_41 {dimension_numbers = #tpu.dot_dimension_numbers<[1], [0], [0], [1], [0, 0, 1, 1], [], []>} : vector<8x64xf32>, vector<64x32xf32>, vector<8x32xf32> -> vector<8x32xf32>
    %134 = arith.addf %69, %133 : vector<8x32xf32>
    %135 = vector.extract_strided_slice %134 {offsets = [7, 0], sizes = [1, 32], strides = [1, 1]} : vector<8x32xf32> to vector<1x32xf32>
    %136 = arith.mulf %135, %135 : vector<1x32xf32>
    %cst_42 = arith.constant dense<0.000000e+00> : vector<1xf32>
    %137 = vector.multi_reduction <add>, %136, %cst_42 [1] : vector<1x32xf32> to vector<1xf32>
    %138 = vector.shape_cast %137 : vector<1xf32> to vector<1x1xf32>
    %cst_43 = arith.constant 3.200000e+01 : f32
    %139 = vector.broadcast %cst_43 : f32 to vector<1x1xf32>
    %140 = arith.divf %138, %139 : vector<1x1xf32>
    %cst_44 = arith.constant 9.99999997E-7 : f32
    %141 = vector.broadcast %cst_44 : f32 to vector<1x1xf32>
    %142 = arith.addf %140, %141 : vector<1x1xf32>
    %143 = math.rsqrt %142 : vector<1x1xf32>
    %144 = vector.broadcast %143 : vector<1x1xf32> to vector<1x32xf32>
    %145 = arith.mulf %135, %144 : vector<1x32xf32>
    %c0_45 = arith.constant 0 : index
    %c0_46 = arith.constant 0 : index
    %146 = vector.load %arg8[%c0_45, %c0_46] : memref<32x256xf32, #tpu.memory_space<vmem>>, vector<32x256xf32>
    %cst_47 = arith.constant dense<0.000000e+00> : vector<1x256xf32>
    %147 = tpu.matmul %145, %146, %cst_47 {dimension_numbers = #tpu.dot_dimension_numbers<[1], [0], [0], [1], [0, 0, 1, 1], [], []>} : vector<1x32xf32>, vector<32x256xf32>, vector<1x256xf32> -> vector<1x256xf32>
    %c0_48 = arith.constant 0 : index
    %c0_49 = arith.constant 0 : index
    %c0_50 = arith.constant 0 : index
    %148 = vector.load %arg9[%c0_48, %c0_49, %c0_50] : memref<1x1x256xf32, #tpu.memory_space<vmem>>, vector<1x1x256xf32>
    %149 = vector.shape_cast %148 : vector<1x1x256xf32> to vector<1x256xf32>
    %150 = vector.shape_cast %147 : vector<1x256xf32> to vector<1x1x256xf32>
    tpu.vector_store %arg9[%c0_48, %c0_49, %c0_50], %150 {strides = array<i32>} : memref<1x1x256xf32, #tpu.memory_space<vmem>>, vector<1x1x256xf32>,
    return
  }
  func.func @transform_0(%arg0: i32) -> (i32, i32, i32) {
    %c0_i32 = arith.constant 0 : i32
    %c0_i32_0 = arith.constant 0 : i32
    %c0_i32_1 = arith.constant 0 : i32
    return %arg0, %c0_i32, %c0_i32_0 : i32, i32, i32
  }
  func.func @transform_1(%arg0: i32) -> (i32, i32, i32) {
    %c0_i32 = arith.constant 0 : i32
    %c0_i32_0 = arith.constant 0 : i32
    %c0_i32_1 = arith.constant 0 : i32
    %c0_i32_2 = arith.constant 0 : i32
    return %c0_i32, %c0_i32_0, %c0_i32_1 : i32, i32, i32
  }
  func.func @transform_2(%arg0: i32) -> (i32, i32, i32) {
    %c0_i32 = arith.constant 0 : i32
    %c0_i32_0 = arith.constant 0 : i32
    %c0_i32_1 = arith.constant 0 : i32
    %c0_i32_2 = arith.constant 0 : i32
    return %c0_i32, %c0_i32_0, %c0_i32_1 : i32, i32, i32
  }
  func.func @transform_3(%arg0: i32) -> (i32, i32, i32) {
    %c0_i32 = arith.constant 0 : i32
    %c0_i32_0 = arith.constant 0 : i32
    %c0_i32_1 = arith.constant 0 : i32
    %c0_i32_2 = arith.constant 0 : i32
    return %c0_i32, %c0_i32_0, %c0_i32_1 : i32, i32, i32
  }
  func.func @transform_4(%arg0: i32) -> (i32, i32) {
    %c0_i32 = arith.constant 0 : i32
    %c0_i32_0 = arith.constant 0 : i32
    %c0_i32_1 = arith.constant 0 : i32
    return %c0_i32, %c0_i32_0 : i32, i32
  }
  func.func @transform_5(%arg0: i32) -> (i32, i32) {
    %c0_i32 = arith.constant 0 : i32
    %c0_i32_0 = arith.constant 0 : i32
    %c0_i32_1 = arith.constant 0 : i32
    return %c0_i32, %c0_i32_0 : i32, i32
  }
  func.func @transform_6(%arg0: i32) -> (i32, i32) {
    %c0_i32 = arith.constant 0 : i32
    %c0_i32_0 = arith.constant 0 : i32
    %c0_i32_1 = arith.constant 0 : i32
    return %c0_i32, %c0_i32_0 : i32, i32
  }
  func.func @transform_7(%arg0: i32) -> (i32, i32) {
    %c0_i32 = arith.constant 0 : i32
    %c0_i32_0 = arith.constant 0 : i32
    %c0_i32_1 = arith.constant 0 : i32
    return %c0_i32, %c0_i32_0 : i32, i32
  }
  func.func @transform_8(%arg0: i32) -> (i32, i32, i32) {
    %c0_i32 = arith.constant 0 : i32
    %c0_i32_0 = arith.constant 0 : i32
    %c0_i32_1 = arith.constant 0 : i32
    return %arg0, %c0_i32, %c0_i32_0 : i32, i32, i32
  }
}

</mosaic_0001>

<llo_original>
// kernel: _lambda_.1
$region0: #{_lambda_.1}
  #allocation0 [shape = 'u32[]', space=smem, size = 0x4, offset = 0x4, fixed_abs, tag = 'smem constant byte address 0x4 - core index']
  #allocation1 [shape = 'u32[72,128]{1,0:T(1,128)}', space=vmem, size = 0x9000, scoped, tag = 'internal scratch']
  %s0 = inlined_call_operand.vmem [shape: f32[2,8,32], index: 0, kind: input, shape index: {}]
  %s1 = inlined_call_operand.vmem [shape: f32[2,32,144], index: 1, kind: input, shape index: {}]
  %s2 = inlined_call_operand.vmem [shape: f32[2,4,16], index: 2, kind: input, shape index: {}]
  %s3 = inlined_call_operand.vmem [shape: f32[2,64,32], index: 3, kind: input, shape index: {}]
  %s4 = inlined_call_operand.vmem [shape: f32[8,8], index: 4, kind: input, shape index: {}]
  %s5 = inlined_call_operand.vmem [shape: f32[8,8], index: 5, kind: input, shape index: {}]
  %s6 = inlined_call_operand.vmem [shape: f32[8,8], index: 6, kind: input, shape index: {}]
  %s7 = inlined_call_operand.vmem [shape: f32[32,256], index: 7, kind: input, shape index: {}]
  %s8 = inlined_call_operand.hbm [shape: f32[2,1,256], index: 8, kind: output, shape index: {}]
  %s9 = sld [smem:[#allocation0]]
  $region65: #{_lambda_.1} parent=0
    _
  %s11 = ssub.s32 1, %s9
  %s12 = scalar_select 0, %s11, %s9
  $region1: #{_lambda_.1} parent=0
    #allocation2 [shape = 'u8[2048]{0}', space=vmem, size = 0x800, scoped, tag = 'output window, operand 0']
    #allocation3 [shape = 's32[2]{0}', space=sflag, size = 0x8, scoped, tag = 'scoped memory for _lambda_.1']
    %13 = vsyncpa [#allocation3], 0
    %s14 = scalar_lea.sflag [#allocation3], 1
    %15 = vsyncpa %s14, 0
    loop: start=0, step=1, limit=4
    $region2: #{_lambda_.1} parent=1 // loop_pre_header
      _
    $region3: #{_lambda_.1} parent=1 // loop_header
      %s17 = sphi 0, %s21
      %p18 = scmp.ge.s32.totalorder %s17, 4
      %s27 = sphi 0, %s29
      %s30 = sphi 0, %s27
      %s31 = sphi 0, %s30
      %s47 = sphi 0, %s31
      %s51 = sphi 0, %s51
      %s53 = sphi 0, %s51
      %s54 = sphi 0, %s53
      %s68 = sphi 0, %s54
      %s72 = sphi 0, %s72
      %s74 = sphi 0, %s72
      %s75 = sphi 0, %s74
      %s89 = sphi 0, %s75
      %s93 = sphi 0, %s93
      %s95 = sphi 0, %s93
      %s96 = sphi 0, %s95
      %s110 = sphi 0, %s96
      %s114 = sphi 0, %s114
      %s116 = sphi 0, %s114
      %s117 = sphi 0, %s116
      %s131 = sphi 0, %s117
      %s135 = sphi 0, %s135
      %s137 = sphi 0, %s135
      %s138 = sphi 0, %s137
      %s152 = sphi 0, %s138
      %s156 = sphi 0, %s156
      %s158 = sphi 0, %s156
      %s159 = sphi 0, %s158
      %s173 = sphi 0, %s159
      %s177 = sphi 0, %s177
      %s179 = sphi 0, %s177
      %s180 = sphi 0, %s179
      %s194 = sphi 0, %s180
      %s200 = sphi 0, %s202
      %s203 = sphi 0, %s200
      %s204 = sphi 0, %s203
      %s220 = sphi 0, %s204
    $region4: #{_lambda_.1} parent=1 // loop_header_branch
      %20 = sbr.rel (%p18) target = $region8
    $region5: #{_lambda_.1} parent=1 // loop_body
      %s22 = ssub.s32 %s17, 1
      %s23 = ssub.s32 %s17, 2
      %s24 = sadd.s32 %s17, 1
      %s25 = ssub.s32 %s17, %s24
      %p26 = scmp.eq.s32.totalorder %s25, 0
      %s28 = sadd.s32 %s27, 1
      %s29 = scalar_select %p26, %s27, %s28
      %p32 = pneg %p26
      %p33 = scmp.eq.s32.totalorder %s17, 1
      %p34 = por %p32, %p33
      %p35 = scmp.ne.s32.totalorder %s27, %s30
      %p36 = scmp.eq.s32.totalorder %s17, 0
      %p37 = por %p35, %p36
      %p38 = scmp.ne.s32.totalorder %s27, %s30
      %p39 = scmp.eq.s32.totalorder %s22, 1
      %p40 = por %p38, %p39
      %p41 = scmp.ne.s32.totalorder %s30, %s31
      %p42 = scmp.eq.s32.totalorder %s22, 0
      %p43 = por %p41, %p42
      %p44 = scmp.ne.s32.totalorder %s30, %s31
      %p45 = scmp.eq.s32.totalorder %s23, 1
      %p46 = por %p44, %p45
      %p48 = scmp.ne.s32.totalorder %s31, %s47
      %p49 = scmp.eq.s32.totalorder %s23, 0
      %p50 = por %p48, %p49
      %s52 = sadd.s32 %s51, 1
      %p55 = scmp.eq.s32.totalorder %s17, 1
      %p56 = scmp.ne.s32.totalorder %s51, %s53
      %p57 = scmp.eq.s32.totalorder %s17, 0
      %p58 = por %p56, %p57
      %p59 = scmp.ne.s32.totalorder %s51, %s53
      %p60 = scmp.eq.s32.totalorder %s22, 1
      %p61 = por %p59, %p60
      %p62 = scmp.ne.s32.totalorder %s53, %s54
      %p63 = scmp.eq.s32.totalorder %s22, 0
      %p64 = por %p62, %p63
      %p65 = scmp.ne.s32.totalorder %s53, %s54
      %p66 = scmp.eq.s32.totalorder %s23, 1
      %p67 = por %p65, %p66
      %p69 = scmp.ne.s32.totalorder %s54, %s68
      %p70 = scmp.eq.s32.totalorder %s23, 0
      %p71 = por %p69, %p70
      %s73 = sadd.s32 %s72, 1
      %p76 = scmp.eq.s32.totalorder %s17, 1
      %p77 = scmp.ne.s32.totalorder %s72, %s74
      %p78 = scmp.eq.s32.totalorder %s17, 0
      %p79 = por %p77, %p78
      %p80 = scmp.ne.s32.totalorder %s72, %s74
      %p81 = scmp.eq.s32.totalorder %s22, 1
      %p82 = por %p80, %p81
      %p83 = scmp.ne.s32.totalorder %s74, %s75
      %p84 = scmp.eq.s32.totalorder %s22, 0
      %p85 = por %p83, %p84
      %p86 = scmp.ne.s32.totalorder %s74, %s75
      %p87 = scmp.eq.s32.totalorder %s23, 1
      %p88 = por %p86, %p87
      %p90 = scmp.ne.s32.totalorder %s75, %s89
      %p91 = scmp.eq.s32.totalorder %s23, 0
      %p92 = por %p90, %p91
      %s94 = sadd.s32 %s93, 1
      %p97 = scmp.eq.s32.totalorder %s17, 1
      %p98 = scmp.ne.s32.totalorder %s93, %s95
      %p99 = scmp.eq.s32.totalorder %s17, 0
      %p100 = por %p98, %p99
      %p101 = scmp.ne.s32.totalorder %s93, %s95
      %p102 = scmp.eq.s32.totalorder %s22, 1
      %p103 = por %p101, %p102
      %p104 = scmp.ne.s32.totalorder %s95, %s96
      %p105 = scmp.eq.s32.totalorder %s22, 0
      %p106 = por %p104, %p105
      %p107 = scmp.ne.s32.totalorder %s95, %s96
      %p108 = scmp.eq.s32.totalorder %s23, 1
      %p109 = por %p107, %p108
      %p111 = scmp.ne.s32.totalorder %s96, %s110
      %p112 = scmp.eq.s32.totalorder %s23, 0
      %p113 = por %p111, %p112
      %s115 = sadd.s32 %s114, 1
      %p118 = scmp.eq.s32.totalorder %s17, 1
      %p119 = scmp.ne.s32.totalorder %s114, %s116
      %p120 = scmp.eq.s32.totalorder %s17, 0
      %p121 = por %p119, %p120
      %p122 = scmp.ne.s32.totalorder %s114, %s116
      %p123 = scmp.eq.s32.totalorder %s22, 1
      %p124 = por %p122, %p123
      %p125 = scmp.ne.s32.totalorder %s116, %s117
      %p126 = scmp.eq.s32.totalorder %s22, 0
      %p127 = por %p125, %p126
      %p128 = scmp.ne.s32.totalorder %s116, %s117
      %p129 = scmp.eq.s32.totalorder %s23, 1
      %p130 = por %p128, %p129
      %p132 = scmp.ne.s32.totalorder %s117, %s131
      %p133 = scmp.eq.s32.totalorder %s23, 0
      %p134 = por %p132, %p133
      %s136 = sadd.s32 %s135, 1
      %p139 = scmp.eq.s32.totalorder %s17, 1
      %p140 = scmp.ne.s32.totalorder %s135, %s137
      %p141 = scmp.eq.s32.totalorder %s17, 0
      %p142 = por %p140, %p141
      %p143 = scmp.ne.s32.totalorder %s135, %s137
      %p144 = scmp.eq.s32.totalorder %s22, 1
      %p145 = por %p143, %p144
      %p146 = scmp.ne.s32.totalorder %s137, %s138
      %p147 = scmp.eq.s32.totalorder %s22, 0
      %p148 = por %p146, %p147
      %p149 = scmp.ne.s32.totalorder %s137, %s138
      %p150 = scmp.eq.s32.totalorder %s23, 1
      %p151 = por %p149, %p150
      %p153 = scmp.ne.s32.totalorder %s138, %s152
      %p154 = scmp.eq.s32.totalorder %s23, 0
      %p155 = por %p153, %p154
      %s157 = sadd.s32 %s156, 1
      %p160 = scmp.eq.s32.totalorder %s17, 1
      %p161 = scmp.ne.s32.totalorder %s156, %s158
      %p162 = scmp.eq.s32.totalorder %s17, 0
      %p163 = por %p161, %p162
      %p164 = scmp.ne.s32.totalorder %s156, %s158
      %p165 = scmp.eq.s32.totalorder %s22, 1
      %p166 = por %p164, %p165
      %p167 = scmp.ne.s32.totalorder %s158, %s159
      %p168 = scmp.eq.s32.totalorder %s22, 0
      %p169 = por %p167, %p168
      %p170 = scmp.ne.s32.totalorder %s158, %s159
      %p171 = scmp.eq.s32.totalorder %s23, 1
      %p172 = por %p170, %p171
      %p174 = scmp.ne.s32.totalorder %s159, %s173
      %p175 = scmp.eq.s32.totalorder %s23, 0
      %p176 = por %p174, %p175
      %s178 = sadd.s32 %s177, 1
      %p181 = scmp.eq.s32.totalorder %s17, 1
      %p182 = scmp.ne.s32.totalorder %s177, %s179
      %p183 = scmp.eq.s32.totalorder %s17, 0
      %p184 = por %p182, %p183
      %p185 = scmp.ne.s32.totalorder %s177, %s179
      %p186 = scmp.eq.s32.totalorder %s22, 1
      %p187 = por %p185, %p186
      %p188 = scmp.ne.s32.totalorder %s179, %s180
      %p189 = scmp.eq.s32.totalorder %s22, 0
      %p190 = por %p188, %p189
      %p191 = scmp.ne.s32.totalorder %s179, %s180
      %p192 = scmp.eq.s32.totalorder %s23, 1
      %p193 = por %p191, %p192
      %p195 = scmp.ne.s32.totalorder %s180, %s194
      %p196 = scmp.eq.s32.totalorder %s23, 0
      %p197 = por %p195, %p196
      %s198 = ssub.s32 %s17, %s24
      %p199 = scmp.eq.s32.totalorder %s198, 0
      %s201 = sadd.s32 %s200, 1
      %s202 = scalar_select %p199, %s200, %s201
      %p205 = pneg %p199
      %p206 = scmp.eq.s32.totalorder %s17, 1
      %p207 = por %p205, %p206
      %p208 = scmp.ne.s32.totalorder %s200, %s203
      %p209 = scmp.eq.s32.totalorder %s17, 0
      %p210 = por %p208, %p209
      %p211 = scmp.ne.s32.totalorder %s200, %s203
      %p212 = scmp.eq.s32.totalorder %s22, 1
      %p213 = por %p211, %p212
      %p214 = scmp.ne.s32.totalorder %s203, %s204
      %p215 = scmp.eq.s32.totalorder %s22, 0
      %p216 = por %p214, %p215
      %p217 = scmp.ne.s32.totalorder %s203, %s204
      %p218 = scmp.eq.s32.totalorder %s23, 1
      %p219 = por %p217, %p218
      %p221 = scmp.ne.s32.totalorder %s204, %s220
      %p222 = scmp.eq.s32.totalorder %s23, 0
      %p223 = por %p221, %p222
      %p224 = scmp.le.s32.totalorder 1, %s17
      %p225 = scmp.lt.s32.totalorder %s17, 3
      %p226 = pnand %p224, %p225
      %p227 = pneg %p226
      // Predicated region
      $region9: #{_lambda_.1} parent=5 // pred_check
        _
      $region10: #{_lambda_.1} parent=5 // pred_check_branch
        %229 = sbr.rel (%p226) target = $region12
      $region11: #{_lambda_.1} parent=5 // pred_region
        %s230 = ssub.s32 %s17, 1
        // Predicated region
        $region13: #{_lambda_.1} parent=11 // pred_check
          %p231 = pneg %p64
        $region14: #{_lambda_.1} parent=11 // pred_check_branch
          %233 = sbr.rel (%p231) target = $region16
        $region15: #{_lambda_.1} parent=11 // pred_region
          _
        $region16: #{_lambda_.1} parent=11 // pred_fallthru
          _
        // Predicated region
        $region17: #{_lambda_.1} parent=11 // pred_check
          %p234 = pneg %p85
        $region18: #{_lambda_.1} parent=11 // pred_check_branch
          %236 = sbr.rel (%p234) target = $region20
        $region19: #{_lambda_.1} parent=11 // pred_region
          _
        $region20: #{_lambda_.1} parent=11 // pred_fallthru
          _
        // Predicated region
        $region21: #{_lambda_.1} parent=11 // pred_check
          %p237 = pneg %p106
        $region22: #{_lambda_.1} parent=11 // pred_check_branch
          %239 = sbr.rel (%p237) target = $region24
        $region23: #{_lambda_.1} parent=11 // pred_region
          _
        $region24: #{_lambda_.1} parent=11 // pred_fallthru
          _
        // Predicated region
        $region25: #{_lambda_.1} parent=11 // pred_check
          %p240 = pneg %p127
        $region26: #{_lambda_.1} parent=11 // pred_check_branch
          %242 = sbr.rel (%p240) target = $region28
        $region27: #{_lambda_.1} parent=11 // pred_region
          _
        $region28: #{_lambda_.1} parent=11 // pred_fallthru
          _
        // Predicated region
        $region29: #{_lambda_.1} parent=11 // pred_check
          %p243 = pneg %p148
        $region30: #{_lambda_.1} parent=11 // pred_check_branch
          %245 = sbr.rel (%p243) target = $region32
        $region31: #{_lambda_.1} parent=11 // pred_region
          _
        $region32: #{_lambda_.1} parent=11 // pred_fallthru
          _
        // Predicated region
        $region33: #{_lambda_.1} parent=11 // pred_check
          %p246 = pneg %p169
        $region34: #{_lambda_.1} parent=11 // pred_check_branch
          %248 = sbr.rel (%p246) target = $region36
        $region35: #{_lambda_.1} parent=11 // pred_region
          _
        $region36: #{_lambda_.1} parent=11 // pred_fallthru
          _
        // Predicated region
        $region37: #{_lambda_.1} parent=11 // pred_check
          %p249 = pneg %p190
        $region38: #{_lambda_.1} parent=11 // pred_check_branch
          %251 = sbr.rel (%p249) target = $region40
        $region39: #{_lambda_.1} parent=11 // pred_region
          _
        $region40: #{_lambda_.1} parent=11 // pred_fallthru
          _
      $region12: #{_lambda_.1} parent=5 // pred_fallthru
        _
      %p252 = scmp.lt.s32.totalorder %s17, 2
      // Predicated region
      $region41: #{_lambda_.1} parent=5 // pred_check
        %p253 = pneg %p252
      $region42: #{_lambda_.1} parent=5 // pred_check_branch
        %255 = sbr.rel (%p253) target = $region44
      $region43: #{_lambda_.1} parent=5 // pred_region
        // Predicated region
        $region45: #{_lambda_.1} parent=43 // pred_check
          %p256 = pneg %p37
        $region46: #{_lambda_.1} parent=43 // pred_check_branch
          %258 = sbr.rel (%p256) target = $region48
        $region47: #{_lambda_.1} parent=43 // pred_region
          %p259 = scmp.lt.s32.totalorder %s17, 1
          %s260 = scalar_select %p259, %s17, 1
          %s261 = smul.addr %s260, 8
          %s262 = scalar_lea.vmem %s0, %s261
        $region48: #{_lambda_.1} parent=43 // pred_fallthru
          _
      $region44: #{_lambda_.1} parent=5 // pred_fallthru
        _
      %p263 = scmp.le.s32.totalorder 1, %s17
      %p264 = scmp.lt.s32.totalorder %s17, 3
      %p265 = pnand %p263, %p264
      %p266 = pneg %p265
      // Predicated region
      $region49: #{_lambda_.1} parent=5 // pred_check
        _
      $region50: #{_lambda_.1} parent=5 // pred_check_branch
        %268 = sbr.rel (%p265) target = $region52
      $region51: #{_lambda_.1} parent=5 // pred_region
        %s269 = ssub.s32 %s17, 1
        %p270 = scmp.lt.s32.totalorder %s22, 1
        %s271 = scalar_select %p270, %s22, 1
        %s272 = smul.addr %s271, 8
        %s273 = scalar_lea.vmem %s0, %s272
        %p274 = pneg %p43
        %p275 = pneg %p40
        %p276 = pneg %p64
        %p277 = pneg %p61
        %p278 = pneg %p85
        %p279 = pneg %p82
        %p280 = pneg %p106
        %p281 = pneg %p103
        %p282 = pneg %p127
        %p283 = pneg %p124
        %p284 = pneg %p148
        %p285 = pneg %p145
        %p286 = pneg %p169
        %p287 = pneg %p166
        %p288 = pneg %p190
        %p289 = pneg %p187
        %p290 = pneg %p216
        %p291 = pneg %p213
        %s292 = sand.u32 %s203, 1
        %s293 = scalar_lea.sflag [#allocation3], %s292
        %s294 = sand.u32 %s203, 1
        %s295 = smul.addr %s294, 2
        %s296 = scalar_lea.vmem [#allocation2], %s295
        %p297 = scmp.lt.s32.totalorder %s22, 1
        %s298 = scalar_select %p297, %s22, 1
        %s299 = smul.addr %s298, 8
        %s300 = scalar_lea.vmem %s0, %s299
        %v301 = vld [vmem:[%s300] sm:$0xff]
        %v302 = vld [vmem:[%s4] sm:$0xff]
        %v303 = vld [vmem:[%s5] sm:$0xff]
        %v304 = vld [vmem:[%s6] sm:$0xff]
        %v305 = vmul.f32 %v301, %v301
        %vm306 = vcmask 261120
        %v307 = vsel %vm306, %v305, 0.0
        %308 = vadd.xlane.f32.xlu0 %v307
        %v309 = vpop.xlane.xlu0 %308
        %v310 = vrcp.pop 32.0
        %v311 = vmul.f32 32.0, %v310
        %v312 = vsub.f32 1.0, %v311
        %v313 = vmul.f32 %v310, %v312
        %v314 = vadd.f32 %v310, %v313
        %vm315 = vweird.f32 %v310
        %v316 = vsel %vm315, %v310, %v314
        %v317 = vmul.f32 %v309, %v316
        %v318 = vadd.f32 %v317, 1e-06
        %v319 = vrsqrt.pop %v318
        %v320 = vmul.f32 %v319, %v318
        %v321 = vmul.f32 %v320, %v319
        %v322 = vmul.f32 0.5, %v321
        %v323 = vsub.f32 1.5, %v322
        %v324 = vmul.f32 %v319, %v323
        %vm325 = vweird.f32 %v318
        %vm326 = vweird.f32 %v319
        %vm327 = vmor %vm325, %vm326
        %v328 = vsel %vm327, %v319, %v324
        %v329 = vmul.f32 %v301, %v328
        %v330 = vld [vmem:[%s1] sm:$0xff]
        %v331 = vld [vmem:[%s1 + $0x8] sm:$0xff]
        %v332 = vld [vmem:[%s1 + $0x10] sm:$0xff]
        %v333 = vld [vmem:[%s1 + $0x18] sm:$0xff]
        %v334 = vld [vmem:[%s1 + $0x20] sm:$0xff]
        %v335 = vld [vmem:[%s1 + $0x28] sm:$0xff]
        %v336 = vld [vmem:[%s1 + $0x30] sm:$0xff]
        %v337 = vld [vmem:[%s1 + $0x38] sm:$0xff]
        %v339 = vsel %vm306, %v329, 0
        %341 = vmatpush.msra.mxu0 0.0
        %342 = vmatpush.msra.mxu0 0.0
        %343 = vmatpush.msra.mxu0 0.0
        %344 = vmatpush.msra.mxu0 0.0
        %345 = vmatpush.msra.mxu0 0.0
        %346 = vmatpush.msra.mxu0 0.0
        %347 = vmatpush.msra.mxu0 0.0
        %348 = vmatpush.msra.mxu0 0.0
        %349 = vmatpush.msra.mxu0 0.0
        %350 = vmatpush.msra.mxu0 0.0
        %351 = vmatpush.msra.mxu0 0.0
        %352 = vmatpush.msra.mxu0 0.0
        %353 = vmatpush.msra.mxu0 %v336
        %354 = vmatpush.msra.mxu0 %v334
        %355 = vmatpush.msra.mxu0 %v332
        %356 = vmatpush.msra.mxu0 %v330
        %357 = vmatmul.f32.gmra.mxu0 %v339
        %v358 = vpop.f32.mrf.mxu0
        %v359 = vadd.f32 0.0, %v358
        %360 = vdwg.mxu0
        %361 = vmatpush.msra.mxu0 0.0
        %362 = vmatpush.msra.mxu0 0.0
        %363 = vmatpush.msra.mxu0 0.0
        %364 = vmatpush.msra.mxu0 0.0
        %365 = vmatpush.msra.mxu0 0.0
        %366 = vmatpush.msra.mxu0 0.0
        %367 = vmatpush.msra.mxu0 0.0
        %368 = vmatpush.msra.mxu0 0.0
        %369 = vmatpush.msra.mxu0 0.0
        %370 = vmatpush.msra.mxu0 0.0
        %371 = vmatpush.msra.mxu0 0.0
        %372 = vmatpush.msra.mxu0 0.0
        %373 = vmatpush.msra.mxu0 %v337
        %374 = vmatpush.msra.mxu0 %v335
        %375 = vmatpush.msra.mxu0 %v333
        %376 = vmatpush.msra.mxu0 %v331
        %377 = vmatmul.f32.gmra.mxu0 %v339
        %v378 = vpop.f32.mrf.mxu0
        %v379 = vadd.f32 0.0, %v378
        %380 = vdwg.mxu0
        %v381 = vxor.u32 %v359, 2147483648
        %v382 = vxor.u32 %v379, 2147483648
        %v383 = vmul.f32 %v381, 1.442695
        %v384 = vpow.pop %v383
        %v385 = vmul.f32 %v382, 1.442695
        %v386 = vpow.pop %v385
        %v387 = vadd.f32 %v384, 1.0
        %v388 = vadd.f32 %v386, 1.0
        %v389 = vrcp.pop %v387
        %v390 = vmul.f32 %v387, %v389
        %v391 = vsub.f32 1.0, %v390
        %v392 = vmul.f32 %v389, %v391
        %v393 = vadd.f32 %v389, %v392
        %vm394 = vweird.f32 %v387
        %vm395 = vweird.f32 %v389
        %vm396 = vmor %vm394, %vm395
        %v397 = vsel %vm396, %v389, %v393
        %v398 = vand.u32 2147483647, %v387
        %vm399 = vcmp.eq.f32.partialorder %v398, 8.507059e+37
        %v400 = vand.u32 %v387, 2147483648
        %v401 = vor.u32 1.1754944e-38, %v400
        %v402 = vsel %vm399, %v401, %v397
        %v403 = vmul.f32 1.0, %v402
        %v404 = vrcp.pop %v388
        %v405 = vmul.f32 %v388, %v404
        %v406 = vsub.f32 1.0, %v405
        %v407 = vmul.f32 %v404, %v406
        %v408 = vadd.f32 %v404, %v407
        %vm409 = vweird.f32 %v388
        %vm410 = vweird.f32 %v404
        %vm411 = vmor %vm409, %vm410
        %v412 = vsel %vm411, %v404, %v408
        %v413 = vand.u32 2147483647, %v388
        %vm414 = vcmp.eq.f32.partialorder %v413, 8.507059e+37
        %v415 = vand.u32 %v388, 2147483648
        %v416 = vor.u32 1.1754944e-38, %v415
        %v417 = vsel %vm414, %v416, %v412
        %v418 = vmul.f32 1.0, %v417
        %v419 = vmul.f32 %v359, %v403
        %v420 = vmul.f32 %v379, %v418
        %v421 = vld [vmem:[%s2] sm:$0xf]
        %v422 = vperm.slane %v421, 0
        %v423 = vmul.f32 %v420, %v422
        %v424 = vperm.slane %v421, 2
        %v425 = vadd.f32 %v423, %v424
        %v426 = vperm.slane %v421, 1
        %v427 = vmul.f32 %v420, %v426
        %v428 = vperm.slane %v421, 3
        %v429 = vadd.f32 %v427, %v428
        %v430 = vmul.f32 %v425, %v302
        %432 = vrot.lane.b32.xlu0 %v303, 8
        %v433 = vpop.permute.xlu0 %432
        %v435 = vmul.f32 %v425, %v433
        %437 = vrot.lane.b32.xlu0 %v435, 120
        %v438 = vpop.permute.xlu0 %437
        %v440 = vsub.f32 %v430, %v438
        %442 = vrot.lane.b32.xlu0 %v302, 8
        %v443 = vpop.permute.xlu0 %442
        %v445 = vmul.f32 %v425, %v443
        %v446 = vmul.f32 %v425, %v303
        %448 = vrot.lane.b32.xlu0 %v446, 8
        %v449 = vpop.permute.xlu0 %448
        %v451 = vadd.f32 %v445, %v449
        %vm452 = vcmask 64512
        %v453 = vsel %vm452, %v440, %v451
        %v454 = vmul.f32 %v429, %v302
        %v455 = vmul.f32 %v429, %v433
        %457 = vrot.lane.b32.xlu0 %v455, 120
        %v458 = vpop.permute.xlu0 %457
        %v460 = vsub.f32 %v454, %v458
        %v461 = vmul.f32 %v429, %v443
        %v462 = vmul.f32 %v429, %v303
        %464 = vrot.lane.b32.xlu0 %v462, 8
        %v465 = vpop.permute.xlu0 %464
        %v467 = vadd.f32 %v461, %v465
        %v468 = vsel %vm452, %v460, %v467
        %vm469 = vcmask 130048
        %v471 = vsel %vm469, %v453, 0
        %v474 = vsel %vm469, %v468, 0
        %476 = vmatpush.xpose.msra.mxu0 0.0
        %477 = vmatpush.xpose.msra.mxu0 0.0
        %478 = vmatpush.xpose.msra.mxu0 0.0
        %479 = vmatpush.xpose.msra.mxu0 0.0
        %480 = vmatpush.xpose.msra.mxu0 0.0
        %481 = vmatpush.xpose.msra.mxu0 0.0
        %482 = vmatpush.xpose.msra.mxu0 0.0
        %483 = vmatpush.xpose.msra.mxu0 0.0
        %484 = vmatpush.xpose.msra.mxu0 0.0
        %485 = vmatpush.xpose.msra.mxu0 0.0
        %486 = vmatpush.xpose.msra.mxu0 0.0
        %487 = vmatpush.xpose.msra.mxu0 0.0
        %488 = vmatpush.xpose.msra.mxu0 0.0
        %489 = vmatpush.xpose.msra.mxu0 0.0
        %490 = vmatpush.xpose.msra.mxu0 0.0
        %491 = vmatpush.xpose.msra.mxu0 %v474
        %492 = vmatmul.f32.gmra.mxu0 %v471
        %v493 = vpop.f32.mrf.mxu0
        %v494 = vadd.f32 0.0, %v493
        %495 = vdwg.mxu0
        %v496 = vmax.f32 %v494, 0.0
        %v497 = vmul.f32 %v496, %v496
        %v498 = vmul.f32 %v497, %v304
        %500 = vrot.lane.b32.xlu0 %v419, 64
        %v501 = vpop.permute.xlu0 %500
        %v504 = vsel %vm452, %v498, 0
        %506 = vmatpush.msra.mxu0 0.0
        %507 = vmatpush.msra.mxu0 0.0
        %508 = vmatpush.msra.mxu0 0.0
        %509 = vmatpush.msra.mxu0 0.0
        %510 = vmatpush.msra.mxu0 0.0
        %511 = vmatpush.msra.mxu0 0.0
        %512 = vmatpush.msra.mxu0 0.0
        %513 = vmatpush.msra.mxu0 0.0
        %514 = vmatpush.msra.mxu0 0.0
        %515 = vmatpush.msra.mxu0 0.0
        %516 = vmatpush.msra.mxu0 0.0
        %517 = vmatpush.msra.mxu0 0.0
        %518 = vmatpush.msra.mxu0 0.0
        %519 = vmatpush.msra.mxu0 0.0
        %520 = vmatpush.msra.mxu0 0.0
        %521 = vmatpush.msra.mxu0 %v501
        %522 = vmatmul.f32.gmra.mxu0 %v504
        %v523 = vpop.f32.mrf.mxu0
        %v524 = vadd.f32 0.0, %v523
        %525 = vdwg.mxu0
        %v526 = vmul.f32 %v419, %v524
        %v527 = vld [vmem:[%s3] sm:$0xff]
        %v528 = vld [vmem:[%s3 + $0x8] sm:$0xff]
        %v529 = vld [vmem:[%s3 + $0x10] sm:$0xff]
        %v530 = vld [vmem:[%s3 + $0x18] sm:$0xff]
        %v531 = vld [vmem:[%s3 + $0x20] sm:$0xff]
        %v532 = vld [vmem:[%s3 + $0x28] sm:$0xff]
        %v533 = vld [vmem:[%s3 + $0x30] sm:$0xff]
        %v534 = vld [vmem:[%s3 + $0x38] sm:$0xff]
        %vm535 = vcmask 523264
        %v537 = vsel %vm535, %v526, 0
        %539 = vmatpush.msra.mxu0 0.0
        %540 = vmatpush.msra.mxu0 0.0
        %541 = vmatpush.msra.mxu0 0.0
        %542 = vmatpush.msra.mxu0 0.0
        %543 = vmatpush.msra.mxu0 0.0
        %544 = vmatpush.msra.mxu0 0.0
        %545 = vmatpush.msra.mxu0 0.0
        %546 = vmatpush.msra.mxu0 0.0
        %547 = vmatpush.msra.mxu0 %v534
        %548 = vmatpush.msra.mxu0 %v533
        %549 = vmatpush.msra.mxu0 %v532
        %550 = vmatpush.msra.mxu0 %v531
        %551 = vmatpush.msra.mxu0 %v530
        %552 = vmatpush.msra.mxu0 %v529
        %553 = vmatpush.msra.mxu0 %v528
        %554 = vmatpush.msra.mxu0 %v527
        %555 = vmatmul.f32.gmra.mxu0 %v537
        %v556 = vpop.f32.mrf.mxu0
        %v557 = vadd.f32 0.0, %v556
        %558 = vdwg.mxu0
        %v559 = vadd.f32 %v301, %v557
        %v560 = vmul.f32 %v559, %v559
        %v561 = vsel %vm306, %v560, 0.0
        %562 = vadd.xlane.f32.xlu0 %v561
        %v563 = vpop.xlane.xlu0 %562
        %v564 = vmul.f32 %v563, %v316
        %v565 = vadd.f32 %v564, 1e-06
        %v566 = vrsqrt.pop %v565
        %v567 = vmul.f32 %v566, %v565
        %v568 = vmul.f32 %v567, %v566
        %v569 = vmul.f32 0.5, %v568
        %v570 = vsub.f32 1.5, %v569
        %v571 = vmul.f32 %v566, %v570
        %vm572 = vweird.f32 %v565
        %vm573 = vweird.f32 %v566
        %vm574 = vmor %vm572, %vm573
        %v575 = vsel %vm574, %v566, %v571
        %v576 = vmul.f32 %v559, %v575
        %s577 = scalar_lea.vmem %s1, 64
        %v578 = vld [vmem:[%s577] sm:$0xff]
        %v579 = vld [vmem:[%s577 + $0x8] sm:$0xff]
        %v580 = vld [vmem:[%s577 + $0x10] sm:$0xff]
        %v581 = vld [vmem:[%s577 + $0x18] sm:$0xff]
        %v582 = vld [vmem:[%s577 + $0x20] sm:$0xff]
        %v583 = vld [vmem:[%s577 + $0x28] sm:$0xff]
        %v584 = vld [vmem:[%s577 + $0x30] sm:$0xff]
        %v585 = vld [vmem:[%s577 + $0x38] sm:$0xff]
        %v587 = vsel %vm306, %v576, 0
        %589 = vmatpush.msra.mxu0 0.0
        %590 = vmatpush.msra.mxu0 0.0
        %591 = vmatpush.msra.mxu0 0.0
        %592 = vmatpush.msra.mxu0 0.0
        %593 = vmatpush.msra.mxu0 0.0
        %594 = vmatpush.msra.mxu0 0.0
        %595 = vmatpush.msra.mxu0 0.0
        %596 = vmatpush.msra.mxu0 0.0
        %597 = vmatpush.msra.mxu0 0.0
        %598 = vmatpush.msra.mxu0 0.0
        %599 = vmatpush.msra.mxu0 0.0
        %600 = vmatpush.msra.mxu0 0.0
        %601 = vmatpush.msra.mxu0 %v584
        %602 = vmatpush.msra.mxu0 %v582
        %603 = vmatpush.msra.mxu0 %v580
        %604 = vmatpush.msra.mxu0 %v578
        %605 = vmatmul.f32.gmra.mxu0 %v587
        %v606 = vpop.f32.mrf.mxu0
        %v607 = vadd.f32 0.0, %v606
        %608 = vdwg.mxu0
        %609 = vmatpush.msra.mxu0 0.0
        %610 = vmatpush.msra.mxu0 0.0
        %611 = vmatpush.msra.mxu0 0.0
        %612 = vmatpush.msra.mxu0 0.0
        %613 = vmatpush.msra.mxu0 0.0
        %614 = vmatpush.msra.mxu0 0.0
        %615 = vmatpush.msra.mxu0 0.0
        %616 = vmatpush.msra.mxu0 0.0
        %617 = vmatpush.msra.mxu0 0.0
        %618 = vmatpush.msra.mxu0 0.0
        %619 = vmatpush.msra.mxu0 0.0
        %620 = vmatpush.msra.mxu0 0.0
        %621 = vmatpush.msra.mxu0 %v585
        %622 = vmatpush.msra.mxu0 %v583
        %623 = vmatpush.msra.mxu0 %v581
        %624 = vmatpush.msra.mxu0 %v579
        %625 = vmatmul.f32.gmra.mxu0 %v587
        %v626 = vpop.f32.mrf.mxu0
        %v627 = vadd.f32 0.0, %v626
        %628 = vdwg.mxu0
        %v629 = vxor.u32 %v607, 2147483648
        %v630 = vxor.u32 %v627, 2147483648
        %v631 = vmul.f32 %v629, 1.442695
        %v632 = vpow.pop %v631
        %v633 = vmul.f32 %v630, 1.442695
        %v634 = vpow.pop %v633
        %v635 = vadd.f32 %v632, 1.0
        %v636 = vadd.f32 %v634, 1.0
        %v637 = vrcp.pop %v635
        %v638 = vmul.f32 %v635, %v637
        %v639 = vsub.f32 1.0, %v638
        %v640 = vmul.f32 %v637, %v639
        %v641 = vadd.f32 %v637, %v640
        %vm642 = vweird.f32 %v635
        %vm643 = vweird.f32 %v637
        %vm644 = vmor %vm642, %vm643
        %v645 = vsel %vm644, %v637, %v641
        %v646 = vand.u32 2147483647, %v635
        %vm647 = vcmp.eq.f32.partialorder %v646, 8.507059e+37
        %v648 = vand.u32 %v635, 2147483648
        %v649 = vor.u32 1.1754944e-38, %v648
        %v650 = vsel %vm647, %v649, %v645
        %v651 = vmul.f32 1.0, %v650
        %v652 = vrcp.pop %v636
        %v653 = vmul.f32 %v636, %v652
        %v654 = vsub.f32 1.0, %v653
        %v655 = vmul.f32 %v652, %v654
        %v656 = vadd.f32 %v652, %v655
        %vm657 = vweird.f32 %v636
        %vm658 = vweird.f32 %v652
        %vm659 = vmor %vm657, %vm658
        %v660 = vsel %vm659, %v652, %v656
        %v661 = vand.u32 2147483647, %v636
        %vm662 = vcmp.eq.f32.partialorder %v661, 8.507059e+37
        %v663 = vand.u32 %v636, 2147483648
        %v664 = vor.u32 1.1754944e-38, %v663
        %v665 = vsel %vm662, %v664, %v660
        %v666 = vmul.f32 1.0, %v665
        %v667 = vmul.f32 %v607, %v651
        %v668 = vmul.f32 %v627, %v666
        %s669 = scalar_lea.vmem %s2, 4
        %v670 = vld [vmem:[%s669] sm:$0xf]
        %v671 = vperm.slane %v670, 0
        %v672 = vmul.f32 %v668, %v671
        %v673 = vperm.slane %v670, 2
        %v674 = vadd.f32 %v672, %v673
        %v675 = vperm.slane %v670, 1
        %v676 = vmul.f32 %v668, %v675
        %v677 = vperm.slane %v670, 3
        %v678 = vadd.f32 %v676, %v677
        %v679 = vmul.f32 %v674, %v302
        %v680 = vmul.f32 %v674, %v433
        %682 = vrot.lane.b32.xlu0 %v680, 120
        %v683 = vpop.permute.xlu0 %682
        %v685 = vsub.f32 %v679, %v683
        %v686 = vmul.f32 %v674, %v443
        %v687 = vmul.f32 %v674, %v303
        %689 = vrot.lane.b32.xlu0 %v687, 8
        %v690 = vpop.permute.xlu0 %689
        %v692 = vadd.f32 %v686, %v690
        %v693 = vsel %vm452, %v685, %v692
        %v694 = vmul.f32 %v678, %v302
        %v695 = vmul.f32 %v678, %v433
        %697 = vrot.lane.b32.xlu0 %v695, 120
        %v698 = vpop.permute.xlu0 %697
        %v700 = vsub.f32 %v694, %v698
        %v701 = vmul.f32 %v678, %v443
        %v702 = vmul.f32 %v678, %v303
        %704 = vrot.lane.b32.xlu0 %v702, 8
        %v705 = vpop.permute.xlu0 %704
        %v707 = vadd.f32 %v701, %v705
        %v708 = vsel %vm452, %v700, %v707
        %v710 = vsel %vm469, %v693, 0
        %v713 = vsel %vm469, %v708, 0
        %715 = vmatpush.xpose.msra.mxu0 0.0
        %716 = vmatpush.xpose.msra.mxu0 0.0
        %717 = vmatpush.xpose.msra.mxu0 0.0
        %718 = vmatpush.xpose.msra.mxu0 0.0
        %719 = vmatpush.xpose.msra.mxu0 0.0
        %720 = vmatpush.xpose.msra.mxu0 0.0
        %721 = vmatpush.xpose.msra.mxu0 0.0
        %722 = vmatpush.xpose.msra.mxu0 0.0
        %723 = vmatpush.xpose.msra.mxu0 0.0
        %724 = vmatpush.xpose.msra.mxu0 0.0
        %725 = vmatpush.xpose.msra.mxu0 0.0
        %726 = vmatpush.xpose.msra.mxu0 0.0
        %727 = vmatpush.xpose.msra.mxu0 0.0
        %728 = vmatpush.xpose.msra.mxu0 0.0
        %729 = vmatpush.xpose.msra.mxu0 0.0
        %730 = vmatpush.xpose.msra.mxu0 %v713
        %731 = vmatmul.f32.gmra.mxu0 %v710
        %v732 = vpop.f32.mrf.mxu0
        %v733 = vadd.f32 0.0, %v732
        %734 = vdwg.mxu0
        %v735 = vmax.f32 %v733, 0.0
        %v736 = vmul.f32 %v735, %v735
        %v737 = vmul.f32 %v736, %v304
        %739 = vrot.lane.b32.xlu0 %v667, 64
        %v740 = vpop.permute.xlu0 %739
        %v743 = vsel %vm452, %v737, 0
        %745 = vmatpush.msra.mxu0 0.0
        %746 = vmatpush.msra.mxu0 0.0
        %747 = vmatpush.msra.mxu0 0.0
        %748 = vmatpush.msra.mxu0 0.0
        %749 = vmatpush.msra.mxu0 0.0
        %750 = vmatpush.msra.mxu0 0.0
        %751 = vmatpush.msra.mxu0 0.0
        %752 = vmatpush.msra.mxu0 0.0
        %753 = vmatpush.msra.mxu0 0.0
        %754 = vmatpush.msra.mxu0 0.0
        %755 = vmatpush.msra.mxu0 0.0
        %756 = vmatpush.msra.mxu0 0.0
        %757 = vmatpush.msra.mxu0 0.0
        %758 = vmatpush.msra.mxu0 0.0
        %759 = vmatpush.msra.mxu0 0.0
        %760 = vmatpush.msra.mxu0 %v740
        %761 = vmatmul.f32.gmra.mxu0 %v743
        %v762 = vpop.f32.mrf.mxu0
        %v763 = vadd.f32 0.0, %v762
        %764 = vdwg.mxu0
        %v765 = vmul.f32 %v667, %v763
        %s766 = scalar_lea.vmem %s3, 64
        %v767 = vld [vmem:[%s766] sm:$0xff]
        %v768 = vld [vmem:[%s766 + $0x8] sm:$0xff]
        %v769 = vld [vmem:[%s766 + $0x10] sm:$0xff]
        %v770 = vld [vmem:[%s766 + $0x18] sm:$0xff]
        %v771 = vld [vmem:[%s766 + $0x20] sm:$0xff]
        %v772 = vld [vmem:[%s766 + $0x28] sm:$0xff]
        %v773 = vld [vmem:[%s766 + $0x30] sm:$0xff]
        %v774 = vld [vmem:[%s766 + $0x38] sm:$0xff]
        %v776 = vsel %vm535, %v765, 0
        %778 = vmatpush.msra.mxu0 0.0
        %779 = vmatpush.msra.mxu0 0.0
        %780 = vmatpush.msra.mxu0 0.0
        %781 = vmatpush.msra.mxu0 0.0
        %782 = vmatpush.msra.mxu0 0.0
        %783 = vmatpush.msra.mxu0 0.0
        %784 = vmatpush.msra.mxu0 0.0
        %785 = vmatpush.msra.mxu0 0.0
        %786 = vmatpush.msra.mxu0 %v774
        %787 = vmatpush.msra.mxu0 %v773
        %788 = vmatpush.msra.mxu0 %v772
        %789 = vmatpush.msra.mxu0 %v771
        %790 = vmatpush.msra.mxu0 %v770
        %791 = vmatpush.msra.mxu0 %v769
        %792 = vmatpush.msra.mxu0 %v768
        %793 = vmatpush.msra.mxu0 %v767
        %794 = vmatmul.f32.gmra.mxu0 %v776
        %v795 = vpop.f32.mrf.mxu0
        %v796 = vadd.f32 0.0, %v795
        %797 = vdwg.mxu0
        %v798 = vadd.f32 %v559, %v796
        %v799 = vmul.f32 %v798, %v798
        %vm800 = vcmask 261127
        %v801 = vsel %vm800, %v799, 0.0
        %802 = vadd.xlane.f32.xlu0 %v801
        %v803 = vpop.xlane.xlu0 %802
        %v804 = vmul.f32 %v803, %v316
        %v805 = vadd.f32 %v804, 1e-06
        %v806 = vrsqrt.pop %v805
        %v807 = vmul.f32 %v806, %v805
        %v808 = vmul.f32 %v807, %v806
        %v809 = vmul.f32 0.5, %v808
        %v810 = vsub.f32 1.5, %v809
        %v811 = vmul.f32 %v806, %v810
        %vm812 = vweird.f32 %v805
        %vm813 = vweird.f32 %v806
        %vm814 = vmor %vm812, %vm813
        %v815 = vsel %vm814, %v806, %v811
        %v816 = vmul.f32 %v798, %v815
        %v817 = vld [vmem:[%s7] sm:$0xff]
        %v818 = vld [vmem:[%s7 + $0x8] sm:$0xff]
        %v819 = vld [vmem:[%s7 + $0x10] sm:$0xff]
        %v820 = vld [vmem:[%s7 + $0x18] sm:$0xff]
        %v821 = vld [vmem:[%s7 + $0x20] sm:$0xff]
        %v822 = vld [vmem:[%s7 + $0x28] sm:$0xff]
        %v823 = vld [vmem:[%s7 + $0x30] sm:$0xff]
        %v824 = vld [vmem:[%s7 + $0x38] sm:$0xff]
        %v826 = vrot.slane %v816, 7
        %v827 = vsel %vm306, %v826, 0
        %829 = vmatpush.msra.mxu0 0.0
        %830 = vmatpush.msra.mxu0 0.0
        %831 = vmatpush.msra.mxu0 0.0
        %832 = vmatpush.msra.mxu0 0.0
        %833 = vmatpush.msra.mxu0 0.0
        %834 = vmatpush.msra.mxu0 0.0
        %835 = vmatpush.msra.mxu0 0.0
        %836 = vmatpush.msra.mxu0 0.0
        %837 = vmatpush.msra.mxu0 0.0
        %838 = vmatpush.msra.mxu0 0.0
        %839 = vmatpush.msra.mxu0 0.0
        %840 = vmatpush.msra.mxu0 0.0
        %841 = vmatpush.msra.mxu0 %v823
        %842 = vmatpush.msra.mxu0 %v821
        %843 = vmatpush.msra.mxu0 %v819
        %844 = vmatpush.msra.mxu0 %v817
        %845 = vmatmul.f32.gmra.mxu0 %v827
        %v846 = vpop.f32.mrf.mxu0
        %v847 = vadd.f32 0.0, %v846
        %848 = vdwg.mxu0
        %849 = vmatpush.msra.mxu0 0.0
        %850 = vmatpush.msra.mxu0 0.0
        %851 = vmatpush.msra.mxu0 0.0
        %852 = vmatpush.msra.mxu0 0.0
        %853 = vmatpush.msra.mxu0 0.0
        %854 = vmatpush.msra.mxu0 0.0
        %855 = vmatpush.msra.mxu0 0.0
        %856 = vmatpush.msra.mxu0 0.0
        %857 = vmatpush.msra.mxu0 0.0
        %858 = vmatpush.msra.mxu0 0.0
        %859 = vmatpush.msra.mxu0 0.0
        %860 = vmatpush.msra.mxu0 0.0
        %861 = vmatpush.msra.mxu0 %v824
        %862 = vmatpush.msra.mxu0 %v822
        %863 = vmatpush.msra.mxu0 %v820
        %864 = vmatpush.msra.mxu0 %v818
        %865 = vmatmul.f32.gmra.mxu0 %v827
        %v866 = vpop.f32.mrf.mxu0
        %v867 = vadd.f32 0.0, %v866
        %868 = vdwg.mxu0
        %v871 = vrot.slane %v867, 7
        %vm872 = vcmask 1040384
        %v873 = vsel %vm872, %v847, %v871
        %v875 = vlaneseq
        %vm876 = vcmp.ge.s32.totalorder %v875, 0
        %vm877 = vcmp.lt.s32.totalorder %v875, 256
        %vm878 = vmand %vm876, %vm877
        %879 = vst.msk [vmem:[%s296] sm:$0x3] %vm878, %v873
        %s880 = sand.u32 %s203, 1
        %s881 = scalar_lea.sflag [#allocation3], %s880
        %s882 = sand.u32 %s203, 1
        %s883 = smul.addr %s882, 2
        %s884 = scalar_lea.vmem [#allocation2], %s883
        // Predicated region
        $region53: #{_lambda_.1} parent=51 // pred_check
          %p885 = pneg %p213
        $region54: #{_lambda_.1} parent=51 // pred_check_branch
          %887 = sbr.rel (%p885) target = $region56
        $region55: #{_lambda_.1} parent=51 // pred_region
          %889 = vsyncadd %s881, 0
          %s890 = smul.addr %s22, 2
          %s891 = scalar_lea.hbm %s8, %s890
          %s893 = sshll.u32 %s884, 4
          %s894 = int_to_ptr.vmem [resolvable:$true] %s893
          %s895 = sshll.u32 %s891, 4
          %s896 = int_to_ptr.hbm [resolvable:$true] %s895
          %898 = dma.vmem_to_hbm [thread:$0]  %s894, 32, %s896, %s881
        $region56: #{_lambda_.1} parent=51 // pred_fallthru
          _
      $region52: #{_lambda_.1} parent=5 // pred_fallthru
        _
      %p899 = scmp.le.s32.totalorder 2, %s17
      // Predicated region
      $region57: #{_lambda_.1} parent=5 // pred_check
        %p900 = pneg %p899
      $region58: #{_lambda_.1} parent=5 // pred_check_branch
        %902 = sbr.rel (%p900) target = $region60
      $region59: #{_lambda_.1} parent=5 // pred_region
        %s903 = ssub.s32 %s17, 2
        // Predicated region
        $region61: #{_lambda_.1} parent=59 // pred_check
          %p904 = pneg %p219
        $region62: #{_lambda_.1} parent=59 // pred_check_branch
          %906 = sbr.rel (%p904) target = $region64
        $region63: #{_lambda_.1} parent=59 // pred_region
          %s907 = sand.u32 %s204, 1
          %s908 = scalar_lea.sflag [#allocation3], %s907
          %s909 = sand.u32 %s204, 1
          %s910 = smul.addr %s909, 2
          %s911 = scalar_lea.vmem [#allocation2], %s910
          %913 = dma.done %s908, 32
        $region64: #{_lambda_.1} parent=59 // pred_fallthru
          _
      $region60: #{_lambda_.1} parent=5 // pred_fallthru
        _
    $region6: #{_lambda_.1} parent=1 // loop_footer
      %s21 = sadd.s32 1, %s17
    $region7: #{_lambda_.1} parent=1 // loop_footer_branch
      %16 = sbr.rel target = $region3
    $region8: #{_lambda_.1} parent=1 // loop_exit
      _
    %914 = vsyncpa [#allocation3], 1
    %s915 = scalar_lea.sflag [#allocation3], 1
    %916 = vsyncpa %s915, 1

</llo_original>
